<compile_context>
chip_gen: v5e
topology: v5e:2x2
jax: 0.10.0
libtpu: 0.0.40
codegen_flags: <defaults>
</compile_context>

<pallas_src>
import math

import jax
import jax.numpy as jnp
from jax.experimental import pallas as pl
from jax.experimental.pallas import tpu as pltpu

EPS = 1e-9
_LANES = 1024          # lane width of the flattened slab (multiple of 128)
_MAX_BLOCK_GROUPS = 64  # 64 x 8 x 1024 x 4B = 2 MiB per input per block


def _dice_kernel(logits_ref, targets_ref, out_ref):
    """Accumulate [sum(p*t), sum(p+t)] partials into a (1,2,8,LANES) block."""
    j = pl.program_id(1)

    @pl.when(j == 0)
    def _():
        out_ref[...] = jnp.zeros_like(out_ref)

    x = logits_ref[...].astype(jnp.float32)   # (G, 8, LANES)
    t = targets_ref[...].astype(jnp.float32)
    p = jax.nn.sigmoid(x)

    # Reduce only over the untiled leading axis -> pure VPU vreg adds; the
    # cross-lane/sublane reduction is deferred to the JAX wrapper.
    out_ref[0, 0] += jnp.sum(p * t, axis=0)   # -> intersection / 2
    out_ref[0, 1] += jnp.sum(p + t, axis=0)   # -> union


def dice_loss(logits: jax.Array, targets: jax.Array, eps: float = EPS) -> jax.Array:
    """JAX/Pallas equivalent of DiceLoss.forward. Returns an f32 scalar."""
    assert logits.shape == targets.shape

    total = math.prod(logits.shape)
    group_elems = 8 * _LANES
    groups = pl.cdiv(total, group_elems)
    block_groups = min(_MAX_BLOCK_GROUPS, groups)
    num_blocks = pl.cdiv(groups, block_groups)

    # Leading "parallel" axis: split across the two TensorCores on v7x.
    num_slices = 2 if num_blocks >= 2 else 1
    blocks_per_slice = pl.cdiv(num_blocks, num_slices)
    padded_groups = num_slices * blocks_per_slice * block_groups
    padded_total = padded_groups * group_elems

    flat_l = logits.reshape(-1)
    flat_t = targets.reshape(-1)
    pad = padded_total - total
    if pad:
        # Neutral padding: sigmoid(-1e4) == 0 in f32 and targets == 0, so the
        # pad contributes nothing to either reduction.
        flat_l = jnp.concatenate(
            [flat_l, jnp.full((pad,), -1e4, dtype=flat_l.dtype)])
        flat_t = jnp.concatenate(
            [flat_t, jnp.zeros((pad,), dtype=flat_t.dtype)])

    logits3d = flat_l.reshape(padded_groups, 8, _LANES)
    targets3d = flat_t.reshape(padded_groups, 8, _LANES)

    in_bytes = padded_total * (jnp.dtype(logits.dtype).itemsize
                               + jnp.dtype(targets.dtype).itemsize)
    out_bytes = num_slices * 2 * 8 * _LANES * 4

    partials = pl.pallas_call(
        _dice_kernel,
        out_shape=jax.ShapeDtypeStruct((num_slices, 2, 8, _LANES), jnp.float32),
        grid_spec=pltpu.PrefetchScalarGridSpec(
            num_scalar_prefetch=0,
            grid=(num_slices, blocks_per_slice),
            in_specs=[
                pl.BlockSpec((block_groups, 8, _LANES),
                             lambda i, j: (i * blocks_per_slice + j, 0, 0)),
                pl.BlockSpec((block_groups, 8, _LANES),
                             lambda i, j: (i * blocks_per_slice + j, 0, 0)),
            ],
            out_specs=pl.BlockSpec((1, 2, 8, _LANES),
                                   lambda i, j: (i, 0, 0, 0)),
        ),
        compiler_params=pltpu.CompilerParams(
            dimension_semantics=("parallel", "arbitrary"),
            vmem_limit_bytes=32 * 1024 * 1024,
        ),
        cost_estimate=pl.CostEstimate(
            flops=4 * padded_total,
            transcendentals=padded_total,
            bytes_accessed=in_bytes + out_bytes,
        ),
    )(logits3d, targets3d)

    # Tiny final reduction + finalize in plain JAX (matches the PyTorch spec:
    # eps only in the numerator).
    intersection = 2.0 * jnp.sum(partials[:, 0])
    union = jnp.sum(partials[:, 1])
    dice_score = (intersection + eps) / union
    return 1.0 - dice_score


def _dice_loss_ref(logits, targets, eps=EPS):
    n = logits.shape[0]
    p = jax.nn.sigmoid(logits.astype(jnp.float32)).reshape(n, -1)
    t = targets.astype(jnp.float32).reshape(n, -1)
    intersection = 2.0 * jnp.sum(p * t)
    union = jnp.sum(p) + jnp.sum(t)
    return 1.0 - (intersection + eps) / union


if __name__ == "__main__":
    key = jax.random.PRNGKey(0)
    k1, k2 = jax.random.split(key)

    # NCHW inputs, consistent with a segmentation logits/targets pair.
    logits = jax.random.normal(k1, (2, 4, 16, 16), dtype=jnp.float32)
    targets = (jax.random.uniform(k2, (2, 4, 16, 16)) > 0.5).astype(jnp.float32)

    out = dice_loss(logits, targets)
    jax.block_until_ready(out)

    ref = _dice_loss_ref(logits, targets)
    assert jnp.allclose(out, ref, atol=1e-5, rtol=1e-5), (out, ref)

    print("KERNEL_OK")
</pallas_src>

<mosaic_0001>
module attributes {stable_mosaic.version = 11 : i64} {
  func.func @_dice_kernel(%arg0: i32, %arg1: i32, %arg2: memref<1x8x1024xf32, #tpu.memory_space<vmem>>, %arg3: memref<1x8x1024xf32, #tpu.memory_space<vmem>>, %arg4: memref<1x2x8x1024xf32, #tpu.memory_space<vmem>>) attributes {dimension_semantics = [#tpu.dimension_semantics<parallel>, #tpu.dimension_semantics<arbitrary>], iteration_bounds = array<i64: 1, 1>, scalar_prefetch = 0 : i64, scratch_operands = 0 : i64, tpu.core_type = #tpu.core_type<tc>, window_params = [{transform_indices = @transform_0, window_bounds = array<i64: 1, 8, 1024>}, {transform_indices = @transform_1, window_bounds = array<i64: 1, 8, 1024>}, {transform_indices = @transform_2, window_bounds = array<i64: 1, 2, 8, 1024>}]} {
    %c0_i32 = arith.constant 0 : i32
    %0 = arith.cmpi eq, %arg1, %c0_i32 : i32
    %1 = arith.extui %0 : i1 to i32
    %c0_i32_0 = arith.constant 0 : i32
    %2 = arith.cmpi ne, %1, %c0_i32_0 : i32
    scf.if %2 {
      %cst_23 = arith.constant 0.000000e+00 : f32
      %26 = vector.broadcast %cst_23 : f32 to vector<1x2x8x1024xf32>
      %c0_24 = arith.constant 0 : index
      %c0_25 = arith.constant 0 : index
      %c0_26 = arith.constant 0 : index
      %c0_27 = arith.constant 0 : index
      %27 = vector.load %arg4[%c0_24, %c0_25, %c0_26, %c0_27] : memref<1x2x8x1024xf32, #tpu.memory_space<vmem>>, vector<1x2x8x1024xf32>
      tpu.vector_store %arg4[%c0_24, %c0_25, %c0_26, %c0_27], %26 {strides = array<i32>} : memref<1x2x8x1024xf32, #tpu.memory_space<vmem>>, vector<1x2x8x1024xf32>,
    } else {
    }
    %c0 = arith.constant 0 : index
    %c0_1 = arith.constant 0 : index
    %c0_2 = arith.constant 0 : index
    %3 = vector.load %arg2[%c0, %c0_1, %c0_2] : memref<1x8x1024xf32, #tpu.memory_space<vmem>>, vector<1x8x1024xf32>
    %c0_3 = arith.constant 0 : index
    %c0_4 = arith.constant 0 : index
    %c0_5 = arith.constant 0 : index
    %4 = vector.load %arg3[%c0_3, %c0_4, %c0_5] : memref<1x8x1024xf32, #tpu.memory_space<vmem>>, vector<1x8x1024xf32>
    %5 = arith.negf %3 : vector<1x8x1024xf32>
    %6 = math.exp %5 : vector<1x8x1024xf32>
    %cst = arith.constant 1.000000e+00 : f32
    %7 = vector.broadcast %cst : f32 to vector<1x8x1024xf32>
    %8 = arith.addf %7, %6 : vector<1x8x1024xf32>
    %9 = arith.divf %7, %8 : vector<1x8x1024xf32>
    %c0_6 = arith.constant 0 : index
    %c0_7 = arith.constant 0 : index
    %c0_8 = arith.constant 0 : index
    %c0_9 = arith.constant 0 : index
    %10 = vector.load %arg4[%c0_6, %c0_7, %c0_8, %c0_9] : memref<1x2x8x1024xf32, #tpu.memory_space<vmem>>, vector<1x1x8x1024xf32>
    %11 = vector.shape_cast %10 : vector<1x1x8x1024xf32> to vector<8x1024xf32>
    %12 = arith.mulf %9, %4 : vector<1x8x1024xf32>
    %cst_10 = arith.constant dense<0.000000e+00> : vector<8x1024xf32>
    %13 = vector.multi_reduction <add>, %12, %cst_10 [0] : vector<1x8x1024xf32> to vector<8x1024xf32>
    %14 = arith.addf %11, %13 : vector<8x1024xf32>
    %c0_11 = arith.constant 0 : index
    %c0_12 = arith.constant 0 : index
    %c0_13 = arith.constant 0 : index
    %c0_14 = arith.constant 0 : index
    %15 = vector.load %arg4[%c0_11, %c0_12, %c0_13, %c0_14] : memref<1x2x8x1024xf32, #tpu.memory_space<vmem>>, vector<1x1x8x1024xf32>
    %16 = vector.shape_cast %15 : vector<1x1x8x1024xf32> to vector<8x1024xf32>
    %17 = vector.shape_cast %14 : vector<8x1024xf32> to vector<1x1x8x1024xf32>
    tpu.vector_store %arg4[%c0_11, %c0_12, %c0_13, %c0_14], %17 {strides = array<i32>} : memref<1x2x8x1024xf32, #tpu.memory_space<vmem>>, vector<1x1x8x1024xf32>,
    %c0_15 = arith.constant 0 : index
    %c1 = arith.constant 1 : index
    %c0_16 = arith.constant 0 : index
    %c0_17 = arith.constant 0 : index
    %18 = vector.load %arg4[%c0_15, %c1, %c0_16, %c0_17] : memref<1x2x8x1024xf32, #tpu.memory_space<vmem>>, vector<1x1x8x1024xf32>
    %19 = vector.shape_cast %18 : vector<1x1x8x1024xf32> to vector<8x1024xf32>
    %20 = arith.addf %9, %4 : vector<1x8x1024xf32>
    %cst_18 = arith.constant dense<0.000000e+00> : vector<8x1024xf32>
    %21 = vector.multi_reduction <add>, %20, %cst_18 [0] : vector<1x8x1024xf32> to vector<8x1024xf32>
    %22 = arith.addf %19, %21 : vector<8x1024xf32>
    %c0_19 = arith.constant 0 : index
    %c1_20 = arith.constant 1 : index
    %c0_21 = arith.constant 0 : index
    %c0_22 = arith.constant 0 : index
    %23 = vector.load %arg4[%c0_19, %c1_20, %c0_21, %c0_22] : memref<1x2x8x1024xf32, #tpu.memory_space<vmem>>, vector<1x1x8x1024xf32>
    %24 = vector.shape_cast %23 : vector<1x1x8x1024xf32> to vector<8x1024xf32>
    %25 = vector.shape_cast %22 : vector<8x1024xf32> to vector<1x1x8x1024xf32>
    tpu.vector_store %arg4[%c0_19, %c1_20, %c0_21, %c0_22], %25 {strides = array<i32>} : memref<1x2x8x1024xf32, #tpu.memory_space<vmem>>, vector<1x1x8x1024xf32>,
    return
  }
  func.func @transform_0(%arg0: i32, %arg1: i32) -> (i32, i32, i32) {
    %c1_i32 = arith.constant 1 : i32
    %0 = arith.muli %arg0, %c1_i32 : i32
    %1 = arith.addi %0, %arg1 : i32
    %c0_i32 = arith.constant 0 : i32
    %c0_i32_0 = arith.constant 0 : i32
    %c0_i32_1 = arith.constant 0 : i32
    return %1, %c0_i32, %c0_i32_0 : i32, i32, i32
  }
  func.func @transform_1(%arg0: i32, %arg1: i32) -> (i32, i32, i32) {
    %c1_i32 = arith.constant 1 : i32
    %0 = arith.muli %arg0, %c1_i32 : i32
    %1 = arith.addi %0, %arg1 : i32
    %c0_i32 = arith.constant 0 : i32
    %c0_i32_0 = arith.constant 0 : i32
    %c0_i32_1 = arith.constant 0 : i32
    return %1, %c0_i32, %c0_i32_0 : i32, i32, i32
  }
  func.func @transform_2(%arg0: i32, %arg1: i32) -> (i32, i32, i32, i32) {
    %c0_i32 = arith.constant 0 : i32
    %c0_i32_0 = arith.constant 0 : i32
    %c0_i32_1 = arith.constant 0 : i32
    %c0_i32_2 = arith.constant 0 : i32
    return %arg0, %c0_i32, %c0_i32_0, %c0_i32_1 : i32, i32, i32, i32
  }
}

</mosaic_0001>

<llo_original>
// kernel: tpu_custom_call.1
$region0: #{tpu_custom_call.1}
  #allocation0 [shape = 'u32[]', space=smem, size = 0x4, offset = 0x4, fixed_abs, tag = 'smem constant byte address 0x4 - core index']
  #allocation1 [shape = 'u32[72,128]{1,0:T(1,128)}', space=vmem, size = 0x9000, scoped, tag = 'internal scratch']
  %s0 = inlined_call_operand.hbm [shape: f32[1,8,1024], index: 0, kind: input, shape index: {}]
  %s1 = inlined_call_operand.hbm [shape: f32[1,8,1024], index: 1, kind: input, shape index: {}]
  %s2 = inlined_call_operand.hbm [shape: f32[1,2,8,1024], index: 2, kind: output, shape index: {}]
  %s3 = sld [smem:[#allocation0]]
  $region30: #{tpu_custom_call.1} parent=0
    _
  %s5 = ssub.s32 1, %s3
  %s6 = scalar_select 0, %s5, %s3
  $region1: #{tpu_custom_call.1} parent=0
    #allocation2 [shape = 'u8[32768]{0}', space=vmem, size = 0x8000, scoped, tag = 'input window, operand 0, single buffered']
    #allocation3 [shape = 's32[1]{0}', space=sflag, size = 0x4, scoped, tag = 'scoped memory for tpu_custom_call.1']
    #allocation4 [shape = 's32[1]{0}', space=sflag, size = 0x4, scoped, tag = 'scoped memory for tpu_custom_call.1']
    #allocation5 [shape = 'u8[32768]{0}', space=vmem, size = 0x8000, scoped, tag = 'input window, operand 1, single buffered']
    #allocation6 [shape = 's32[1]{0}', space=sflag, size = 0x4, scoped, tag = 'scoped memory for tpu_custom_call.1']
    #allocation7 [shape = 'u8[65536]{0}', space=vmem, size = 0x10000, scoped, tag = 'output window, operand 0, single buffered']
    %7 = vsyncpa [#allocation3], 0
    %8 = vsyncpa [#allocation6], 0
    %9 = vsyncpa [#allocation4], 0
    // Predicated region
    $region2: #{tpu_custom_call.1} parent=1 // pred_check
      _
    $region3: #{tpu_custom_call.1} parent=1 // pred_check_branch
      %11 = sbr.rel (0) target = $region5
    $region4: #{tpu_custom_call.1} parent=1 // pred_region
      %s12 = sadd.s32 0, 0
      %14 = vsyncadd [#allocation3], 0
      %s15 = smul.addr %s12, 8
      %s16 = smul.addr %s15, 8
      %s17 = scalar_lea.hbm %s0, %s16
      %s19 = sshll.u32 %s17, 4
      %s20 = int_to_ptr.hbm [resolvable:$true] %s19
      %s21 = sshll.u32 [#allocation2], 4
      %s22 = int_to_ptr.vmem [resolvable:$true] %s21
      %24 = dma.hbm_to_vmem [thread:$0]  %s20, 1024, %s22, [#allocation3]
    $region5: #{tpu_custom_call.1} parent=1 // pred_fallthru
      _
    // Predicated region
    $region6: #{tpu_custom_call.1} parent=1 // pred_check
      _
    $region7: #{tpu_custom_call.1} parent=1 // pred_check_branch
      %26 = sbr.rel (0) target = $region9
    $region8: #{tpu_custom_call.1} parent=1 // pred_region
      %s27 = sadd.s32 0, 0
      %29 = vsyncadd [#allocation6], 0
      %s30 = smul.addr %s27, 8
      %s31 = smul.addr %s30, 8
      %s32 = scalar_lea.hbm %s1, %s31
      %s34 = sshll.u32 %s32, 4
      %s35 = int_to_ptr.hbm [resolvable:$true] %s34
      %s36 = sshll.u32 [#allocation5], 4
      %s37 = int_to_ptr.vmem [resolvable:$true] %s36
      %39 = dma.hbm_to_vmem [thread:$0]  %s35, 1024, %s37, [#allocation6]
    $region9: #{tpu_custom_call.1} parent=1 // pred_fallthru
      _
    // Predicated region
    $region10: #{tpu_custom_call.1} parent=1 // pred_check
      _
    $region11: #{tpu_custom_call.1} parent=1 // pred_check_branch
      %41 = sbr.rel (0) target = $region13
    $region12: #{tpu_custom_call.1} parent=1 // pred_region
      %43 = dma.done [#allocation3], 1024
    $region13: #{tpu_custom_call.1} parent=1 // pred_fallthru
      _
    // Predicated region
    $region14: #{tpu_custom_call.1} parent=1 // pred_check
      _
    $region15: #{tpu_custom_call.1} parent=1 // pred_check_branch
      %45 = sbr.rel (0) target = $region17
    $region16: #{tpu_custom_call.1} parent=1 // pred_region
      %47 = dma.done [#allocation6], 1024
    $region17: #{tpu_custom_call.1} parent=1 // pred_fallthru
      _
    %s48 = sadd.s32 0, 0
    %s49 = sadd.s32 0, 0
    %p50 = scmp.eq.s32.totalorder 0, 0
    // Predicated region
    $region18: #{tpu_custom_call.1} parent=1 // pred_check
      %p51 = pneg %p50
    $region19: #{tpu_custom_call.1} parent=1 // pred_check_branch
      %53 = sbr.rel (%p51) target = $region21
    $region20: #{tpu_custom_call.1} parent=1 // pred_region
      %54 = vst [vmem:[#allocation7] sm:$0xff] 0.0
      %55 = vst [vmem:[#allocation7 + $0x8] sm:$0xff] 0.0
      %56 = vst [vmem:[#allocation7 + $0x10] sm:$0xff] 0.0
      %57 = vst [vmem:[#allocation7 + $0x18] sm:$0xff] 0.0
      %58 = vst [vmem:[#allocation7 + $0x20] sm:$0xff] 0.0
      %59 = vst [vmem:[#allocation7 + $0x28] sm:$0xff] 0.0
      %60 = vst [vmem:[#allocation7 + $0x30] sm:$0xff] 0.0
      %61 = vst [vmem:[#allocation7 + $0x38] sm:$0xff] 0.0
      %62 = vst [vmem:[#allocation7 + $0x40] sm:$0xff] 0.0
      %63 = vst [vmem:[#allocation7 + $0x48] sm:$0xff] 0.0
      %64 = vst [vmem:[#allocation7 + $0x50] sm:$0xff] 0.0
      %65 = vst [vmem:[#allocation7 + $0x58] sm:$0xff] 0.0
      %66 = vst [vmem:[#allocation7 + $0x60] sm:$0xff] 0.0
      %67 = vst [vmem:[#allocation7 + $0x68] sm:$0xff] 0.0
      %68 = vst [vmem:[#allocation7 + $0x70] sm:$0xff] 0.0
      %69 = vst [vmem:[#allocation7 + $0x78] sm:$0xff] 0.0
    $region21: #{tpu_custom_call.1} parent=1 // pred_fallthru
      _
    %v70 = vld [vmem:[#allocation2] sm:$0xff]
    %v71 = vld [vmem:[#allocation2 + $0x8] sm:$0xff]
    %v72 = vld [vmem:[#allocation2 + $0x10] sm:$0xff]
    %v73 = vld [vmem:[#allocation2 + $0x18] sm:$0xff]
    %v74 = vld [vmem:[#allocation2 + $0x20] sm:$0xff]
    %v75 = vld [vmem:[#allocation2 + $0x28] sm:$0xff]
    %v76 = vld [vmem:[#allocation2 + $0x30] sm:$0xff]
    %v77 = vld [vmem:[#allocation2 + $0x38] sm:$0xff]
    %v78 = vld [vmem:[#allocation5] sm:$0xff]
    %v79 = vld [vmem:[#allocation5 + $0x8] sm:$0xff]
    %v80 = vld [vmem:[#allocation5 + $0x10] sm:$0xff]
    %v81 = vld [vmem:[#allocation5 + $0x18] sm:$0xff]
    %v82 = vld [vmem:[#allocation5 + $0x20] sm:$0xff]
    %v83 = vld [vmem:[#allocation5 + $0x28] sm:$0xff]
    %v84 = vld [vmem:[#allocation5 + $0x30] sm:$0xff]
    %v85 = vld [vmem:[#allocation5 + $0x38] sm:$0xff]
    %v86 = vxor.u32 %v70, 2147483648
    %v87 = vxor.u32 %v71, 2147483648
    %v88 = vxor.u32 %v72, 2147483648
    %v89 = vxor.u32 %v73, 2147483648
    %v90 = vxor.u32 %v74, 2147483648
    %v91 = vxor.u32 %v75, 2147483648
    %v92 = vxor.u32 %v76, 2147483648
    %v93 = vxor.u32 %v77, 2147483648
    %v94 = vmul.f32 %v86, 1.442695
    %v95 = vpow.pop %v94
    %v96 = vmul.f32 %v87, 1.442695
    %v97 = vpow.pop %v96
    %v98 = vmul.f32 %v88, 1.442695
    %v99 = vpow.pop %v98
    %v100 = vmul.f32 %v89, 1.442695
    %v101 = vpow.pop %v100
    %v102 = vmul.f32 %v90, 1.442695
    %v103 = vpow.pop %v102
    %v104 = vmul.f32 %v91, 1.442695
    %v105 = vpow.pop %v104
    %v106 = vmul.f32 %v92, 1.442695
    %v107 = vpow.pop %v106
    %v108 = vmul.f32 %v93, 1.442695
    %v109 = vpow.pop %v108
    %v110 = vadd.f32 %v95, 1.0
    %v111 = vadd.f32 %v97, 1.0
    %v112 = vadd.f32 %v99, 1.0
    %v113 = vadd.f32 %v101, 1.0
    %v114 = vadd.f32 %v103, 1.0
    %v115 = vadd.f32 %v105, 1.0
    %v116 = vadd.f32 %v107, 1.0
    %v117 = vadd.f32 %v109, 1.0
    %v118 = vrcp.pop %v110
    %v119 = vmul.f32 %v110, %v118
    %v120 = vsub.f32 1.0, %v119
    %v121 = vmul.f32 %v118, %v120
    %v122 = vadd.f32 %v118, %v121
    %vm123 = vweird.f32 %v110
    %vm124 = vweird.f32 %v118
    %vm125 = vmor %vm123, %vm124
    %v126 = vsel %vm125, %v118, %v122
    %v127 = vand.u32 2147483647, %v110
    %vm128 = vcmp.eq.f32.partialorder %v127, 8.507059e+37
    %v129 = vand.u32 %v110, 2147483648
    %v130 = vor.u32 1.1754944e-38, %v129
    %v131 = vsel %vm128, %v130, %v126
    %v132 = vmul.f32 1.0, %v131
    %v133 = vrcp.pop %v111
    %v134 = vmul.f32 %v111, %v133
    %v135 = vsub.f32 1.0, %v134
    %v136 = vmul.f32 %v133, %v135
    %v137 = vadd.f32 %v133, %v136
    %vm138 = vweird.f32 %v111
    %vm139 = vweird.f32 %v133
    %vm140 = vmor %vm138, %vm139
    %v141 = vsel %vm140, %v133, %v137
    %v142 = vand.u32 2147483647, %v111
    %vm143 = vcmp.eq.f32.partialorder %v142, 8.507059e+37
    %v144 = vand.u32 %v111, 2147483648
    %v145 = vor.u32 1.1754944e-38, %v144
    %v146 = vsel %vm143, %v145, %v141
    %v147 = vmul.f32 1.0, %v146
    %v148 = vrcp.pop %v112
    %v149 = vmul.f32 %v112, %v148
    %v150 = vsub.f32 1.0, %v149
    %v151 = vmul.f32 %v148, %v150
    %v152 = vadd.f32 %v148, %v151
    %vm153 = vweird.f32 %v112
    %vm154 = vweird.f32 %v148
    %vm155 = vmor %vm153, %vm154
    %v156 = vsel %vm155, %v148, %v152
    %v157 = vand.u32 2147483647, %v112
    %vm158 = vcmp.eq.f32.partialorder %v157, 8.507059e+37
    %v159 = vand.u32 %v112, 2147483648
    %v160 = vor.u32 1.1754944e-38, %v159
    %v161 = vsel %vm158, %v160, %v156
    %v162 = vmul.f32 1.0, %v161
    %v163 = vrcp.pop %v113
    %v164 = vmul.f32 %v113, %v163
    %v165 = vsub.f32 1.0, %v164
    %v166 = vmul.f32 %v163, %v165
    %v167 = vadd.f32 %v163, %v166
    %vm168 = vweird.f32 %v113
    %vm169 = vweird.f32 %v163
    %vm170 = vmor %vm168, %vm169
    %v171 = vsel %vm170, %v163, %v167
    %v172 = vand.u32 2147483647, %v113
    %vm173 = vcmp.eq.f32.partialorder %v172, 8.507059e+37
    %v174 = vand.u32 %v113, 2147483648
    %v175 = vor.u32 1.1754944e-38, %v174
    %v176 = vsel %vm173, %v175, %v171
    %v177 = vmul.f32 1.0, %v176
    %v178 = vrcp.pop %v114
    %v179 = vmul.f32 %v114, %v178
    %v180 = vsub.f32 1.0, %v179
    %v181 = vmul.f32 %v178, %v180
    %v182 = vadd.f32 %v178, %v181
    %vm183 = vweird.f32 %v114
    %vm184 = vweird.f32 %v178
    %vm185 = vmor %vm183, %vm184
    %v186 = vsel %vm185, %v178, %v182
    %v187 = vand.u32 2147483647, %v114
    %vm188 = vcmp.eq.f32.partialorder %v187, 8.507059e+37
    %v189 = vand.u32 %v114, 2147483648
    %v190 = vor.u32 1.1754944e-38, %v189
    %v191 = vsel %vm188, %v190, %v186
    %v192 = vmul.f32 1.0, %v191
    %v193 = vrcp.pop %v115
    %v194 = vmul.f32 %v115, %v193
    %v195 = vsub.f32 1.0, %v194
    %v196 = vmul.f32 %v193, %v195
    %v197 = vadd.f32 %v193, %v196
    %vm198 = vweird.f32 %v115
    %vm199 = vweird.f32 %v193
    %vm200 = vmor %vm198, %vm199
    %v201 = vsel %vm200, %v193, %v197
    %v202 = vand.u32 2147483647, %v115
    %vm203 = vcmp.eq.f32.partialorder %v202, 8.507059e+37
    %v204 = vand.u32 %v115, 2147483648
    %v205 = vor.u32 1.1754944e-38, %v204
    %v206 = vsel %vm203, %v205, %v201
    %v207 = vmul.f32 1.0, %v206
    %v208 = vrcp.pop %v116
    %v209 = vmul.f32 %v116, %v208
    %v210 = vsub.f32 1.0, %v209
    %v211 = vmul.f32 %v208, %v210
    %v212 = vadd.f32 %v208, %v211
    %vm213 = vweird.f32 %v116
    %vm214 = vweird.f32 %v208
    %vm215 = vmor %vm213, %vm214
    %v216 = vsel %vm215, %v208, %v212
    %v217 = vand.u32 2147483647, %v116
    %vm218 = vcmp.eq.f32.partialorder %v217, 8.507059e+37
    %v219 = vand.u32 %v116, 2147483648
    %v220 = vor.u32 1.1754944e-38, %v219
    %v221 = vsel %vm218, %v220, %v216
    %v222 = vmul.f32 1.0, %v221
    %v223 = vrcp.pop %v117
    %v224 = vmul.f32 %v117, %v223
    %v225 = vsub.f32 1.0, %v224
    %v226 = vmul.f32 %v223, %v225
    %v227 = vadd.f32 %v223, %v226
    %vm228 = vweird.f32 %v117
    %vm229 = vweird.f32 %v223
    %vm230 = vmor %vm228, %vm229
    %v231 = vsel %vm230, %v223, %v227
    %v232 = vand.u32 2147483647, %v117
    %vm233 = vcmp.eq.f32.partialorder %v232, 8.507059e+37
    %v234 = vand.u32 %v117, 2147483648
    %v235 = vor.u32 1.1754944e-38, %v234
    %v236 = vsel %vm233, %v235, %v231
    %v237 = vmul.f32 1.0, %v236
    %v238 = vld [vmem:[#allocation7] sm:$0xff]
    %v239 = vld [vmem:[#allocation7 + $0x8] sm:$0xff]
    %v240 = vld [vmem:[#allocation7 + $0x10] sm:$0xff]
    %v241 = vld [vmem:[#allocation7 + $0x18] sm:$0xff]
    %v242 = vld [vmem:[#allocation7 + $0x20] sm:$0xff]
    %v243 = vld [vmem:[#allocation7 + $0x28] sm:$0xff]
    %v244 = vld [vmem:[#allocation7 + $0x30] sm:$0xff]
    %v245 = vld [vmem:[#allocation7 + $0x38] sm:$0xff]
    %v246 = vmul.f32 %v132, %v78
    %v247 = vmul.f32 %v147, %v79
    %v248 = vmul.f32 %v162, %v80
    %v249 = vmul.f32 %v177, %v81
    %v250 = vmul.f32 %v192, %v82
    %v251 = vmul.f32 %v207, %v83
    %v252 = vmul.f32 %v222, %v84
    %v253 = vmul.f32 %v237, %v85
    %v254 = vadd.f32 %v246, 0.0
    %v255 = vadd.f32 %v247, 0.0
    %v256 = vadd.f32 %v248, 0.0
    %v257 = vadd.f32 %v249, 0.0
    %v258 = vadd.f32 %v250, 0.0
    %v259 = vadd.f32 %v251, 0.0
    %v260 = vadd.f32 %v252, 0.0
    %v261 = vadd.f32 %v253, 0.0
    %v262 = vadd.f32 %v238, %v254
    %v263 = vadd.f32 %v239, %v255
    %v264 = vadd.f32 %v240, %v256
    %v265 = vadd.f32 %v241, %v257
    %v266 = vadd.f32 %v242, %v258
    %v267 = vadd.f32 %v243, %v259
    %v268 = vadd.f32 %v244, %v260
    %v269 = vadd.f32 %v245, %v261
    %270 = vst [vmem:[#allocation7] sm:$0xff] %v262
    %271 = vst [vmem:[#allocation7 + $0x8] sm:$0xff] %v263
    %272 = vst [vmem:[#allocation7 + $0x10] sm:$0xff] %v264
    %273 = vst [vmem:[#allocation7 + $0x18] sm:$0xff] %v265
    %274 = vst [vmem:[#allocation7 + $0x20] sm:$0xff] %v266
    %275 = vst [vmem:[#allocation7 + $0x28] sm:$0xff] %v267
    %276 = vst [vmem:[#allocation7 + $0x30] sm:$0xff] %v268
    %277 = vst [vmem:[#allocation7 + $0x38] sm:$0xff] %v269
    %s278 = scalar_lea.vmem [#allocation7], 64
    %v279 = vld [vmem:[%s278] sm:$0xff]
    %v280 = vld [vmem:[%s278 + $0x8] sm:$0xff]
    %v281 = vld [vmem:[%s278 + $0x10] sm:$0xff]
    %v282 = vld [vmem:[%s278 + $0x18] sm:$0xff]
    %v283 = vld [vmem:[%s278 + $0x20] sm:$0xff]
    %v284 = vld [vmem:[%s278 + $0x28] sm:$0xff]
    %v285 = vld [vmem:[%s278 + $0x30] sm:$0xff]
    %v286 = vld [vmem:[%s278 + $0x38] sm:$0xff]
    %v287 = vadd.f32 %v132, %v78
    %v288 = vadd.f32 %v147, %v79
    %v289 = vadd.f32 %v162, %v80
    %v290 = vadd.f32 %v177, %v81
    %v291 = vadd.f32 %v192, %v82
    %v292 = vadd.f32 %v207, %v83
    %v293 = vadd.f32 %v222, %v84
    %v294 = vadd.f32 %v237, %v85
    %v295 = vadd.f32 %v287, 0.0
    %v296 = vadd.f32 %v288, 0.0
    %v297 = vadd.f32 %v289, 0.0
    %v298 = vadd.f32 %v290, 0.0
    %v299 = vadd.f32 %v291, 0.0
    %v300 = vadd.f32 %v292, 0.0
    %v301 = vadd.f32 %v293, 0.0
    %v302 = vadd.f32 %v294, 0.0
    %v303 = vadd.f32 %v279, %v295
    %v304 = vadd.f32 %v280, %v296
    %v305 = vadd.f32 %v281, %v297
    %v306 = vadd.f32 %v282, %v298
    %v307 = vadd.f32 %v283, %v299
    %v308 = vadd.f32 %v284, %v300
    %v309 = vadd.f32 %v285, %v301
    %v310 = vadd.f32 %v286, %v302
    %311 = vst [vmem:[%s278] sm:$0xff] %v303
    %312 = vst [vmem:[%s278 + $0x8] sm:$0xff] %v304
    %313 = vst [vmem:[%s278 + $0x10] sm:$0xff] %v305
    %314 = vst [vmem:[%s278 + $0x18] sm:$0xff] %v306
    %315 = vst [vmem:[%s278 + $0x20] sm:$0xff] %v307
    %316 = vst [vmem:[%s278 + $0x28] sm:$0xff] %v308
    %317 = vst [vmem:[%s278 + $0x30] sm:$0xff] %v309
    %318 = vst [vmem:[%s278 + $0x38] sm:$0xff] %v310
    // Predicated region
    $region22: #{tpu_custom_call.1} parent=1 // pred_check
      _
    $region23: #{tpu_custom_call.1} parent=1 // pred_check_branch
      %320 = sbr.rel (0) target = $region25
    $region24: #{tpu_custom_call.1} parent=1 // pred_region
      %322 = vsyncadd [#allocation4], 0
      %s323 = sshll.u32 [#allocation7], 4
      %s324 = int_to_ptr.vmem [resolvable:$true] %s323
      %s325 = sshll.u32 %s2, 4
      %s326 = int_to_ptr.hbm [resolvable:$true] %s325
      %331 = dma.vmem_to_hbm [thread:$0]  %s324, 2048, %s326, [#allocation4], 1024, 1024, 64
    $region25: #{tpu_custom_call.1} parent=1 // pred_fallthru
      _
    // Predicated region
    $region26: #{tpu_custom_call.1} parent=1 // pred_check
      _
    $region27: #{tpu_custom_call.1} parent=1 // pred_check_branch
      %333 = sbr.rel (0) target = $region29
    $region28: #{tpu_custom_call.1} parent=1 // pred_region
      %335 = dma.done [#allocation4], 2048
    $region29: #{tpu_custom_call.1} parent=1 // pred_fallthru
      _
    %336 = vsyncpa [#allocation3], 1
    %337 = vsyncpa [#allocation6], 1
    %338 = vsyncpa [#allocation4], 1

</llo_original>
